<compile_context>
chip_gen: v6e
topology: v6e:2x2x1
jax: 0.10.0
libtpu: 0.0.40
codegen_flags: <defaults>
</compile_context>

<pallas_src>
import jax
import jax.numpy as jnp
from jax.experimental import pallas as pl
from jax.experimental.pallas import tpu as pltpu


# --------------------------------------------------------------------------- #
# Kernels
# --------------------------------------------------------------------------- #
def _direct_crop_kernel(s: int, H: int, W: int):
    """grid=(): one strided HBM->HBM DMA copying exactly the cropped window."""

    def kernel(x_hbm, o_hbm, sem):
        cp = pltpu.make_async_copy(
            x_hbm.at[:, s:H - s, s:W - s],   # (NC, Ho, Wo) source window
            o_hbm,                           # contiguous (NC, Ho, Wo) destination
            sem.at[0],
        )
        cp.start()
        cp.wait()

    return kernel


def _staged_crop_kernel(s: int, H: int, W: int):
    """BlockSpec-pipelined: contiguous slab in, in-VMEM crop, contiguous slab out."""

    def kernel(x_ref, o_ref):
        o_ref[...] = x_ref[:, s:H - s, s:W - s]

    return kernel


# --------------------------------------------------------------------------- #
# Wrapper
# --------------------------------------------------------------------------- #
def _largest_divisor_within(n: int, per_unit_bytes: int, budget_bytes: int) -> int:
    best = 1
    for c in range(1, n + 1):
        if n % c == 0 and c * per_unit_bytes <= budget_bytes:
            best = c
    return best


def shave_block(x: jax.Array, s: int, *,
                vmem_budget_bytes: int = 8 << 20,
                min_hbm_burst_bytes: int = 512) -> jax.Array:
    """Equivalent of torch `x[:, :, s:-s, s:-s]` for NCHW input."""
    N, C, H, W = x.shape
    assert s > 0 and 2 * s < H and 2 * s < W, "crop must leave a non-empty window"
    Ho, Wo = H - 2 * s, W - 2 * s
    NC = N * C
    itemsize = jnp.dtype(x.dtype).itemsize

    xr = x.reshape(NC, H, W)                 # free: collapse of contiguous leading dims
    out_shape = jax.ShapeDtypeStruct((NC, Ho, Wo), x.dtype)
    out_bytes = NC * Ho * Wo * itemsize

    if Wo * itemsize >= min_hbm_burst_bytes:
        # ---- direct path: byte-minimal single strided HBM->HBM DMA ---------- #
        out = pl.pallas_call(
            _direct_crop_kernel(s, H, W),
            out_shape=out_shape,
            in_specs=[pl.BlockSpec(memory_space=pl.ANY)],   # raw HBM ref, no auto-DMA
            out_specs=pl.BlockSpec(memory_space=pl.ANY),    # filled directly by the DMA
            scratch_shapes=[pltpu.SemaphoreType.DMA((1,))],
            cost_estimate=pl.CostEstimate(
                flops=0, transcendentals=0, bytes_accessed=2 * out_bytes),
        )(xr)
    else:
        # ---- staged path: contiguous HBM bursts via the BlockSpec pipeline -- #
        # Double-buffered input (ctile,H,W) + output (ctile,Ho,Wo) per image.
        per_image_bytes = 2 * (H * W + Ho * Wo) * itemsize
        ctile = _largest_divisor_within(NC, per_image_bytes, vmem_budget_bytes)
        per_step_bytes = ctile * per_image_bytes
        vmem_limit = None
        if per_step_bytes > (12 << 20):       # one giant image: raise scoped VMEM limit
            vmem_limit = min(per_step_bytes + (4 << 20), 100 << 20)

        out = pl.pallas_call(
            _staged_crop_kernel(s, H, W),
            out_shape=out_shape,
            grid=(NC // ctile,),
            in_specs=[pl.BlockSpec((ctile, H, W), lambda i: (i, 0, 0))],
            out_specs=pl.BlockSpec((ctile, Ho, Wo), lambda i: (i, 0, 0)),
            compiler_params=pltpu.CompilerParams(
                # Steps are independent (no cross-step DMA state), so v7x may
                # shard the axis across its two TensorCores; harmless on v5e/v6e.
                dimension_semantics=("parallel",),
                vmem_limit_bytes=vmem_limit,
            ),
            cost_estimate=pl.CostEstimate(
                flops=0, transcendentals=0,
                bytes_accessed=NC * H * W * itemsize + out_bytes),
        )(xr)

    return out.reshape(N, C, Ho, Wo)


# --------------------------------------------------------------------------- #
# Self-test
# --------------------------------------------------------------------------- #
if __name__ == "__main__":
    key = jax.random.PRNGKey(0)
    k1, k2, k3, k4 = jax.random.split(key, 4)

    # 1) Module-implied small shape: narrow-Wo staged path, single chunk.
    x1 = jax.random.normal(k1, (2, 4, 16, 16), dtype=jnp.float32)
    o1 = jax.block_until_ready(shave_block(x1, 2))
    assert o1.shape == (2, 4, 12, 12) and o1.dtype == x1.dtype
    assert jnp.array_equal(o1, x1[:, :, 2:-2, 2:-2]), "staged crop mismatch"

    # 2) Staged path, forced multi-chunk grid (tiny VMEM budget -> ctile=1).
    x2 = jax.random.normal(k2, (3, 2, 12, 20), dtype=jnp.float32)
    o2 = jax.block_until_ready(shave_block(x2, 1, vmem_budget_bytes=4096))
    assert jnp.array_equal(o2, x2[:, :, 1:-1, 1:-1]), "multi-chunk staged crop mismatch"

    # 3) Wide-Wo direct path: one whole-tensor strided HBM->HBM DMA.
    x3 = jax.random.normal(k3, (1, 3, 24, 140), dtype=jnp.float32)
    o3 = jax.block_until_ready(shave_block(x3, 2))
    assert jnp.array_equal(o3, x3[:, :, 2:-2, 2:-2]), "direct-DMA crop mismatch"

    # 4) dtype-agnostic check (bf16, staged path).
    x4 = jax.random.normal(k4, (2, 2, 16, 16), dtype=jnp.bfloat16)
    o4 = jax.block_until_ready(shave_block(x4, 2))
    assert jnp.array_equal(o4, x4[:, :, 2:-2, 2:-2]), "bf16 crop mismatch"

    print("KERNEL_OK")
</pallas_src>

<mosaic_0001>
module attributes {stable_mosaic.version = 11 : i64} {
  func.func @kernel(%arg0: i32, %arg1: memref<8x16x16xf32, #tpu.memory_space<vmem>>, %arg2: memref<8x12x12xf32, #tpu.memory_space<vmem>>) attributes {dimension_semantics = [#tpu.dimension_semantics<parallel>], iteration_bounds = array<i64: 1>, scalar_prefetch = 0 : i64, scratch_operands = 0 : i64, tpu.core_type = #tpu.core_type<tc>, window_params = [{transform_indices = @transform_0, window_bounds = array<i64: 8, 16, 16>}, {transform_indices = @transform_1, window_bounds = array<i64: 8, 12, 12>}]} {
    %c0 = arith.constant 0 : index
    %c2 = arith.constant 2 : index
    %c2_0 = arith.constant 2 : index
    %0 = vector.load %arg1[%c0, %c2, %c2_0] : memref<8x16x16xf32, #tpu.memory_space<vmem>>, vector<8x12x12xf32>
    %c0_1 = arith.constant 0 : index
    %c0_2 = arith.constant 0 : index
    %c0_3 = arith.constant 0 : index
    %1 = vector.load %arg2[%c0_1, %c0_2, %c0_3] : memref<8x12x12xf32, #tpu.memory_space<vmem>>, vector<8x12x12xf32>
    tpu.vector_store %arg2[%c0_1, %c0_2, %c0_3], %0 {strides = array<i32>} : memref<8x12x12xf32, #tpu.memory_space<vmem>>, vector<8x12x12xf32>,
    return
  }
  func.func @transform_0(%arg0: i32) -> (i32, i32, i32) {
    %c0_i32 = arith.constant 0 : i32
    %c0_i32_0 = arith.constant 0 : i32
    %c0_i32_1 = arith.constant 0 : i32
    return %arg0, %c0_i32, %c0_i32_0 : i32, i32, i32
  }
  func.func @transform_1(%arg0: i32) -> (i32, i32, i32) {
    %c0_i32 = arith.constant 0 : i32
    %c0_i32_0 = arith.constant 0 : i32
    %c0_i32_1 = arith.constant 0 : i32
    return %arg0, %c0_i32, %c0_i32_0 : i32, i32, i32
  }
}

</mosaic_0001>

<llo_original>
// kernel: tpu_custom_call.1
$region0: #{tpu_custom_call.1}
  #allocation0 [shape = 'u32[]', space=smem, size = 0x4, offset = 0x4, fixed_abs, tag = 'smem constant byte address 0x4 - core index']
  #allocation1 [shape = 'u32[144,128]{1,0:T(1,128)}', space=vmem, size = 0x12000, scoped, tag = 'internal scratch']
  %s0 = inlined_call_operand.hbm [shape: f32[8,16,16], index: 0, kind: input, shape index: {}]
  %s1 = inlined_call_operand.vmem [shape: f32[8,12,12], index: 1, kind: output, shape index: {}]
  %s2 = sld [smem:[#allocation0]]
  $region18: #{tpu_custom_call.1} parent=0
    _
  %s4 = ssub.s32 1, %s2
  %s5 = scalar_select 0, %s4, %s2
  $region1: #{tpu_custom_call.1} parent=0
    #allocation2 [shape = 'u8[65536]{0}', space=vmem, size = 0x10000, scoped, tag = 'input window, operand 0, single buffered']
    #allocation3 [shape = 's32[1]{0}', space=sflag, size = 0x4, scoped, tag = 'scoped memory for tpu_custom_call.1']
    %6 = vsyncpa [#allocation3], 0
    // Predicated region
    $region2: #{tpu_custom_call.1} parent=1 // pred_check
      _
    $region3: #{tpu_custom_call.1} parent=1 // pred_check_branch
      %8 = sbr.rel (0) target = $region5
    $region4: #{tpu_custom_call.1} parent=1 // pred_region
      %s10 = ssub.s32 2048, 2048
      %11 = vsyncadd [#allocation3], %s10
      %s12 = sshll.u32 [#allocation2], 4
      %s13 = int_to_ptr.vmem [resolvable:$true] %s12
      %18 = dma.hbm_to_vmem [thread:$0]  %s0, 2048, %s13, [#allocation3], 128, 128, 8
    $region5: #{tpu_custom_call.1} parent=1 // pred_fallthru
      _
    // Predicated region
    $region6: #{tpu_custom_call.1} parent=1 // pred_check
      _
    $region7: #{tpu_custom_call.1} parent=1 // pred_check_branch
      %20 = sbr.rel (0) target = $region9
    $region8: #{tpu_custom_call.1} parent=1 // pred_region
      %21 = dma.done [#allocation3], 2048
    $region9: #{tpu_custom_call.1} parent=1 // pred_fallthru
      _
    %v22 = vld [vmem:[#allocation2 + $0x2] sm:$0xff]
    %v23 = vld [vmem:[#allocation2 + $0xa] sm:$0xf]
    %v24 = vld [vmem:[#allocation2 + $0x12] sm:$0xff]
    %v25 = vld [vmem:[#allocation2 + $0x1a] sm:$0xf]
    %v26 = vld [vmem:[#allocation2 + $0x22] sm:$0xff]
    %v27 = vld [vmem:[#allocation2 + $0x2a] sm:$0xf]
    %v28 = vld [vmem:[#allocation2 + $0x32] sm:$0xff]
    %v29 = vld [vmem:[#allocation2 + $0x3a] sm:$0xf]
    %v30 = vld [vmem:[#allocation2 + $0x42] sm:$0xff]
    %v31 = vld [vmem:[#allocation2 + $0x4a] sm:$0xf]
    %v32 = vld [vmem:[#allocation2 + $0x52] sm:$0xff]
    %v33 = vld [vmem:[#allocation2 + $0x5a] sm:$0xf]
    %v34 = vld [vmem:[#allocation2 + $0x62] sm:$0xff]
    %v35 = vld [vmem:[#allocation2 + $0x6a] sm:$0xf]
    %v36 = vld [vmem:[#allocation2 + $0x72] sm:$0xff]
    %v37 = vld [vmem:[#allocation2 + $0x7a] sm:$0xf]
    %54 = vrot.lane.b32.xlu0 %v22, 126
    %v55 = vpop.permute.xlu0 %54
    %56 = vrot.lane.b32.xlu0 %v23, 126
    %v57 = vpop.permute.xlu0 %56
    %58 = vrot.lane.b32.xlu0 %v24, 126
    %v59 = vpop.permute.xlu0 %58
    %60 = vrot.lane.b32.xlu0 %v25, 126
    %v61 = vpop.permute.xlu0 %60
    %62 = vrot.lane.b32.xlu0 %v26, 126
    %v63 = vpop.permute.xlu0 %62
    %64 = vrot.lane.b32.xlu0 %v27, 126
    %v65 = vpop.permute.xlu0 %64
    %66 = vrot.lane.b32.xlu0 %v28, 126
    %v67 = vpop.permute.xlu0 %66
    %68 = vrot.lane.b32.xlu0 %v29, 126
    %v69 = vpop.permute.xlu0 %68
    %70 = vrot.lane.b32.xlu0 %v30, 126
    %v71 = vpop.permute.xlu0 %70
    %72 = vrot.lane.b32.xlu0 %v31, 126
    %v73 = vpop.permute.xlu0 %72
    %74 = vrot.lane.b32.xlu0 %v32, 126
    %v75 = vpop.permute.xlu0 %74
    %76 = vrot.lane.b32.xlu0 %v33, 126
    %v77 = vpop.permute.xlu0 %76
    %78 = vrot.lane.b32.xlu0 %v34, 126
    %v79 = vpop.permute.xlu0 %78
    %80 = vrot.lane.b32.xlu0 %v35, 126
    %v81 = vpop.permute.xlu0 %80
    %82 = vrot.lane.b32.xlu0 %v36, 126
    %v83 = vpop.permute.xlu0 %82
    %84 = vrot.lane.b32.xlu0 %v37, 126
    %v85 = vpop.permute.xlu0 %84
    %vm102 = vcmask 97280
    %103 = vst.msk [vmem:[%s1] sm:$0xff] %vm102, %v55
    %vm104 = vcmask 93184
    %105 = vst.msk [vmem:[%s1 + $0x8] sm:$0xf] %vm104, %v57
    %106 = vst.msk [vmem:[%s1 + $0x10] sm:$0xff] %vm102, %v59
    %107 = vst.msk [vmem:[%s1 + $0x18] sm:$0xf] %vm104, %v61
    %108 = vst.msk [vmem:[%s1 + $0x20] sm:$0xff] %vm102, %v63
    %109 = vst.msk [vmem:[%s1 + $0x28] sm:$0xf] %vm104, %v65
    %110 = vst.msk [vmem:[%s1 + $0x30] sm:$0xff] %vm102, %v67
    %111 = vst.msk [vmem:[%s1 + $0x38] sm:$0xf] %vm104, %v69
    %112 = vst.msk [vmem:[%s1 + $0x40] sm:$0xff] %vm102, %v71
    %113 = vst.msk [vmem:[%s1 + $0x48] sm:$0xf] %vm104, %v73
    %114 = vst.msk [vmem:[%s1 + $0x50] sm:$0xff] %vm102, %v75
    %115 = vst.msk [vmem:[%s1 + $0x58] sm:$0xf] %vm104, %v77
    %116 = vst.msk [vmem:[%s1 + $0x60] sm:$0xff] %vm102, %v79
    %117 = vst.msk [vmem:[%s1 + $0x68] sm:$0xf] %vm104, %v81
    %118 = vst.msk [vmem:[%s1 + $0x70] sm:$0xff] %vm102, %v83
    %119 = vst.msk [vmem:[%s1 + $0x78] sm:$0xf] %vm104, %v85
    // Predicated region
    $region10: #{tpu_custom_call.1} parent=1 // pred_check
      _
    $region11: #{tpu_custom_call.1} parent=1 // pred_check_branch
      %121 = sbr.rel (0) target = $region13
    $region12: #{tpu_custom_call.1} parent=1 // pred_region
      _
    $region13: #{tpu_custom_call.1} parent=1 // pred_fallthru
      _
    // Predicated region
    $region14: #{tpu_custom_call.1} parent=1 // pred_check
      _
    $region15: #{tpu_custom_call.1} parent=1 // pred_check_branch
      %123 = sbr.rel (0) target = $region17
    $region16: #{tpu_custom_call.1} parent=1 // pred_region
      _
    $region17: #{tpu_custom_call.1} parent=1 // pred_fallthru
      _
    %124 = vsyncpa [#allocation3], 1

</llo_original>
